<compile_context>
chip_gen: v6e
topology: v6e:2x2x1
jax: 0.10.0
libtpu: 0.0.40
codegen_flags: <defaults>
</compile_context>

<pallas_src>
import functools

import jax
import jax.numpy as jnp
from jax import lax
from jax.experimental import pallas as pl
from jax.experimental.pallas import tpu as pltpu

LANE = 128  # pad every weight/bias column dimension to a full lane tile


def _pad_cols(a, width=LANE):
    return jnp.pad(a, ((0, 0), (0, width - a.shape[1])))


def pack_params(params, channels):
    """Host-side (offline) packing.

    Weight slab rows (each block lane-padded to 128 columns, E = channels):
      [0E:1E]  w_in1^T  (E, 3E)  -- 1/sqrt(E) folded into the Q columns
      [1E:2E]  w_out1^T (E, E)
      [2E:3E]  w_in2^T  (E, 3E)  -- 1/sqrt(E) folded into the Q columns
      [3E:4E]  w_out2^T (E, E)
      [4E:5E]  w_mlp^T  (E, classes)
    Bias slab rows: [b_in1(scaled q) | b_out1 | b_in2(scaled q) | b_out2 | b_mlp]
    """
    E = channels
    scale = 1.0 / jnp.sqrt(jnp.float32(E))

    def fold_w(w_in_T):                    # (E, 3E): scale the Q columns
        return w_in_T.at[:, 0:E].multiply(scale)

    def fold_b(b_in):                      # (1, 3E): scale the Q part
        return b_in.at[:, 0:E].multiply(scale)

    w_slab = jnp.concatenate([
        _pad_cols(fold_w(params["w_in1"].T)),
        _pad_cols(params["w_out1"].T),
        _pad_cols(fold_w(params["w_in2"].T)),
        _pad_cols(params["w_out2"].T),
        _pad_cols(params["w_mlp"].T),
    ], axis=0).astype(jnp.float32)         # (5E, 128)

    b_slab = jnp.concatenate([
        _pad_cols(fold_b(params["b_in1"])),
        _pad_cols(params["b_out1"]),
        _pad_cols(fold_b(params["b_in2"])),
        _pad_cols(params["b_out2"]),
        _pad_cols(params["b_mlp"]),
    ], axis=0).astype(jnp.float32)         # (5, 128)

    return w_slab, b_slab


def _mha_fused(x, w_in_T, b_in, w_out_T, b_out, E):
    """Single-head attention on (S, E) activations.

    w_in_T : (E, 128) lane-padded [Wq|Wk|Wv|0], scale pre-folded into Q cols.
    w_out_T: (E, 128) lane-padded [Wo|0].
    Returns (S, 128); only columns [0:E] are meaningful (rest are zero).
    """
    # One fused MXU push for Q/K/V instead of three separate dots.
    qkv = jnp.dot(x, w_in_T, preferred_element_type=jnp.float32) + b_in
    q = qkv[:, 0:E]
    k = qkv[:, E:2 * E]
    v = qkv[:, 2 * E:3 * E]

    # q @ k^T without an in-kernel transpose: contract last dims of both.
    s = lax.dot_general(q, k, (((1,), (1,)), ((), ())),
                        preferred_element_type=jnp.float32)
    s = s - jnp.max(s, axis=-1, keepdims=True)
    p = jnp.exp(s)
    p = p * pl.reciprocal(jnp.sum(p, axis=-1, keepdims=True), approx=True)

    attn = jnp.dot(p, v, preferred_element_type=jnp.float32)
    return jnp.dot(attn, w_out_T, preferred_element_type=jnp.float32) + b_out


def self_attention2_kernel(x_ref, w_ref, b_ref, o_ref, *, embed_dim):
    E = embed_dim
    x = x_ref[...].astype(jnp.float32)                       # (S, E)

    # --- mh1 + residual ---
    y = _mha_fused(x,
                   w_ref[0 * E:1 * E, :], b_ref[0:1, :],
                   w_ref[1 * E:2 * E, :], b_ref[1:2, :], E)
    x = x + y[:, 0:E]

    # --- mh2 (no residual, matching the reference module) ---
    y = _mha_fused(x,
                   w_ref[2 * E:3 * E, :], b_ref[2:3, :],
                   w_ref[3 * E:4 * E, :], b_ref[3:4, :], E)
    x = y[:, 0:E]

    # --- mlp: Flatten (bs,1,C)->(bs,C) is a no-op; lane-dense 128-wide store
    out = jnp.dot(x, w_ref[4 * E:5 * E, :],
                  preferred_element_type=jnp.float32) + b_ref[4:5, :]
    o_ref[...] = out.astype(o_ref.dtype)


def self_attention2(x, w_slab, b_slab, *, channels, classes):
    """x: (bs, channels) f32; packed slabs from pack_params -> (bs, classes)."""
    S = x.shape[0]
    vmem = pl.BlockSpec(memory_space=pltpu.MemorySpace.VMEM)
    out_pad = pl.pallas_call(
        functools.partial(self_attention2_kernel, embed_dim=channels),
        out_shape=jax.ShapeDtypeStruct((S, LANE), jnp.float32),
        in_specs=[vmem, vmem, vmem],
        out_specs=vmem,
    )(x, w_slab, b_slab)
    return out_pad[:, :classes]


def _reference(x, p):
    """Pure-jnp reference matching PyTorch SelfAttention2 semantics."""
    def mha(x, w_in, b_in, w_out, b_out):
        E = x.shape[1]
        q = x @ w_in[:E].T + b_in[0, :E]
        k = x @ w_in[E:2 * E].T + b_in[0, E:2 * E]
        v = x @ w_in[2 * E:].T + b_in[0, 2 * E:]
        s = (q @ k.T) / jnp.sqrt(jnp.float32(E))
        a = jax.nn.softmax(s, axis=-1)
        return (a @ v) @ w_out.T + b_out[0]

    y = mha(x, p["w_in1"], p["b_in1"], p["w_out1"], p["b_out1"])
    x = x + y
    x = mha(x, p["w_in2"], p["b_in2"], p["w_out2"], p["b_out2"])
    return x @ p["w_mlp"].T + p["b_mlp"][0]


if __name__ == "__main__":
    bs, channels, classes = 8, 32, 10

    key = jax.random.PRNGKey(0)
    keys = jax.random.split(key, 11)

    def init(k, shape, scale=0.1):
        return jax.random.normal(k, shape, jnp.float32) * scale

    x = jax.random.normal(keys[0], (bs, channels), jnp.float32)

    # PyTorch-layout parameters: Linear weight (out, in); in_proj (3E, E).
    params = dict(
        w_in1=init(keys[1], (3 * channels, channels)),
        b_in1=init(keys[2], (1, 3 * channels)),
        w_out1=init(keys[3], (channels, channels)),
        b_out1=init(keys[4], (1, channels)),
        w_in2=init(keys[5], (3 * channels, channels)),
        b_in2=init(keys[6], (1, 3 * channels)),
        w_out2=init(keys[7], (channels, channels)),
        b_out2=init(keys[8], (1, channels)),
        w_mlp=init(keys[9], (classes, channels)),
        b_mlp=init(keys[10], (1, classes)),
    )

    # Offline packing: 10 params -> 1 weight slab + 1 bias slab.
    w_slab, b_slab = pack_params(params, channels)
    w_slab, b_slab = jax.block_until_ready((w_slab, b_slab))

    out = jax.block_until_ready(
        self_attention2(x, w_slab, b_slab, channels=channels, classes=classes))
    ref = jax.block_until_ready(_reference(x, params))

    assert out.shape == (bs, classes)
    # approx-reciprocal softmax slightly loosens precision vs. exact divide.
    err = float(jnp.max(jnp.abs(out - ref)))
    assert err < 1e-3, f"mismatch vs reference (max abs err {err})"

    print("KERNEL_OK")
</pallas_src>

<mosaic_0001>
module attributes {stable_mosaic.version = 11 : i64} {
  func.func @self_attention2_kernel(%arg0: memref<8x32xf32, #tpu.memory_space<vmem>>, %arg1: memref<160x128xf32, #tpu.memory_space<vmem>>, %arg2: memref<5x128xf32, #tpu.memory_space<vmem>>, %arg3: memref<8x128xf32, #tpu.memory_space<vmem>>) attributes {dimension_semantics = [], scalar_prefetch = 0 : i64, scratch_operands = 0 : i64, tpu.core_type = #tpu.core_type<tc>} {
    %c0 = arith.constant 0 : index
    %c0_0 = arith.constant 0 : index
    %0 = vector.load %arg0[%c0, %c0_0] : memref<8x32xf32, #tpu.memory_space<vmem>>, vector<8x32xf32>
    %c0_1 = arith.constant 0 : index
    %c0_2 = arith.constant 0 : index
    %1 = vector.load %arg1[%c0_1, %c0_2] : memref<160x128xf32, #tpu.memory_space<vmem>>, vector<32x128xf32>
    %c0_3 = arith.constant 0 : index
    %c0_4 = arith.constant 0 : index
    %2 = vector.load %arg2[%c0_3, %c0_4] : memref<5x128xf32, #tpu.memory_space<vmem>>, vector<1x128xf32>
    %c32 = arith.constant 32 : index
    %c0_5 = arith.constant 0 : index
    %3 = vector.load %arg1[%c32, %c0_5] : memref<160x128xf32, #tpu.memory_space<vmem>>, vector<32x128xf32>
    %c1 = arith.constant 1 : index
    %c0_6 = arith.constant 0 : index
    %4 = vector.load %arg2[%c1, %c0_6] : memref<5x128xf32, #tpu.memory_space<vmem>>, vector<1x128xf32>
    %cst = arith.constant dense<0.000000e+00> : vector<8x128xf32>
    %5 = tpu.matmul %0, %1, %cst {dimension_numbers = #tpu.dot_dimension_numbers<[1], [0], [0], [1], [0, 0, 1, 1], [], []>} : vector<8x32xf32>, vector<32x128xf32>, vector<8x128xf32> -> vector<8x128xf32>
    %6 = vector.broadcast %2 : vector<1x128xf32> to vector<8x128xf32>
    %7 = arith.addf %5, %6 : vector<8x128xf32>
    %8 = vector.extract_strided_slice %7 {offsets = [0, 0], sizes = [8, 32], strides = [1, 1]} : vector<8x128xf32> to vector<8x32xf32>
    %9 = vector.extract_strided_slice %7 {offsets = [0, 32], sizes = [8, 32], strides = [1, 1]} : vector<8x128xf32> to vector<8x32xf32>
    %10 = vector.extract_strided_slice %7 {offsets = [0, 64], sizes = [8, 32], strides = [1, 1]} : vector<8x128xf32> to vector<8x32xf32>
    %cst_7 = arith.constant dense<0.000000e+00> : vector<8x8xf32>
    %11 = tpu.matmul %8, %9, %cst_7 {dimension_numbers = #tpu.dot_dimension_numbers<[1], [1], [0], [0], [0, 0, 1, 0], [], []>} : vector<8x32xf32>, vector<8x32xf32>, vector<8x8xf32> -> vector<8x8xf32>
    %cst_8 = arith.constant dense<0xFF800000> : vector<8xf32>
    %12 = vector.multi_reduction <maximumf>, %11, %cst_8 [1] : vector<8x8xf32> to vector<8xf32>
    %13 = vector.shape_cast %12 : vector<8xf32> to vector<8x1xf32>
    %14 = vector.broadcast %13 : vector<8x1xf32> to vector<8x8xf32>
    %15 = arith.subf %11, %14 : vector<8x8xf32>
    %16 = math.exp %15 : vector<8x8xf32>
    %cst_9 = arith.constant dense<0.000000e+00> : vector<8xf32>
    %17 = vector.multi_reduction <add>, %16, %cst_9 [1] : vector<8x8xf32> to vector<8xf32>
    %18 = vector.shape_cast %17 : vector<8xf32> to vector<8x1xf32>
    %19 = tpu.reciprocal %18 {approx = true} : vector<8x1xf32> -> vector<8x1xf32>
    %20 = vector.broadcast %19 : vector<8x1xf32> to vector<8x8xf32>
    %21 = arith.mulf %16, %20 : vector<8x8xf32>
    %cst_10 = arith.constant dense<0.000000e+00> : vector<8x32xf32>
    %22 = tpu.matmul %21, %10, %cst_10 {dimension_numbers = #tpu.dot_dimension_numbers<[1], [0], [0], [1], [0, 0, 1, 1], [], []>} : vector<8x8xf32>, vector<8x32xf32>, vector<8x32xf32> -> vector<8x32xf32>
    %cst_11 = arith.constant dense<0.000000e+00> : vector<8x128xf32>
    %23 = tpu.matmul %22, %3, %cst_11 {dimension_numbers = #tpu.dot_dimension_numbers<[1], [0], [0], [1], [0, 0, 1, 1], [], []>} : vector<8x32xf32>, vector<32x128xf32>, vector<8x128xf32> -> vector<8x128xf32>
    %24 = vector.broadcast %4 : vector<1x128xf32> to vector<8x128xf32>
    %25 = arith.addf %23, %24 : vector<8x128xf32>
    %26 = vector.extract_strided_slice %25 {offsets = [0, 0], sizes = [8, 32], strides = [1, 1]} : vector<8x128xf32> to vector<8x32xf32>
    %27 = arith.addf %0, %26 : vector<8x32xf32>
    %c64 = arith.constant 64 : index
    %c0_12 = arith.constant 0 : index
    %28 = vector.load %arg1[%c64, %c0_12] : memref<160x128xf32, #tpu.memory_space<vmem>>, vector<32x128xf32>
    %c2 = arith.constant 2 : index
    %c0_13 = arith.constant 0 : index
    %29 = vector.load %arg2[%c2, %c0_13] : memref<5x128xf32, #tpu.memory_space<vmem>>, vector<1x128xf32>
    %c96 = arith.constant 96 : index
    %c0_14 = arith.constant 0 : index
    %30 = vector.load %arg1[%c96, %c0_14] : memref<160x128xf32, #tpu.memory_space<vmem>>, vector<32x128xf32>
    %c3 = arith.constant 3 : index
    %c0_15 = arith.constant 0 : index
    %31 = vector.load %arg2[%c3, %c0_15] : memref<5x128xf32, #tpu.memory_space<vmem>>, vector<1x128xf32>
    %cst_16 = arith.constant dense<0.000000e+00> : vector<8x128xf32>
    %32 = tpu.matmul %27, %28, %cst_16 {dimension_numbers = #tpu.dot_dimension_numbers<[1], [0], [0], [1], [0, 0, 1, 1], [], []>} : vector<8x32xf32>, vector<32x128xf32>, vector<8x128xf32> -> vector<8x128xf32>
    %33 = vector.broadcast %29 : vector<1x128xf32> to vector<8x128xf32>
    %34 = arith.addf %32, %33 : vector<8x128xf32>
    %35 = vector.extract_strided_slice %34 {offsets = [0, 0], sizes = [8, 32], strides = [1, 1]} : vector<8x128xf32> to vector<8x32xf32>
    %36 = vector.extract_strided_slice %34 {offsets = [0, 32], sizes = [8, 32], strides = [1, 1]} : vector<8x128xf32> to vector<8x32xf32>
    %37 = vector.extract_strided_slice %34 {offsets = [0, 64], sizes = [8, 32], strides = [1, 1]} : vector<8x128xf32> to vector<8x32xf32>
    %cst_17 = arith.constant dense<0.000000e+00> : vector<8x8xf32>
    %38 = tpu.matmul %35, %36, %cst_17 {dimension_numbers = #tpu.dot_dimension_numbers<[1], [1], [0], [0], [0, 0, 1, 0], [], []>} : vector<8x32xf32>, vector<8x32xf32>, vector<8x8xf32> -> vector<8x8xf32>
    %cst_18 = arith.constant dense<0xFF800000> : vector<8xf32>
    %39 = vector.multi_reduction <maximumf>, %38, %cst_18 [1] : vector<8x8xf32> to vector<8xf32>
    %40 = vector.shape_cast %39 : vector<8xf32> to vector<8x1xf32>
    %41 = vector.broadcast %40 : vector<8x1xf32> to vector<8x8xf32>
    %42 = arith.subf %38, %41 : vector<8x8xf32>
    %43 = math.exp %42 : vector<8x8xf32>
    %cst_19 = arith.constant dense<0.000000e+00> : vector<8xf32>
    %44 = vector.multi_reduction <add>, %43, %cst_19 [1] : vector<8x8xf32> to vector<8xf32>
    %45 = vector.shape_cast %44 : vector<8xf32> to vector<8x1xf32>
    %46 = tpu.reciprocal %45 {approx = true} : vector<8x1xf32> -> vector<8x1xf32>
    %47 = vector.broadcast %46 : vector<8x1xf32> to vector<8x8xf32>
    %48 = arith.mulf %43, %47 : vector<8x8xf32>
    %cst_20 = arith.constant dense<0.000000e+00> : vector<8x32xf32>
    %49 = tpu.matmul %48, %37, %cst_20 {dimension_numbers = #tpu.dot_dimension_numbers<[1], [0], [0], [1], [0, 0, 1, 1], [], []>} : vector<8x8xf32>, vector<8x32xf32>, vector<8x32xf32> -> vector<8x32xf32>
    %cst_21 = arith.constant dense<0.000000e+00> : vector<8x128xf32>
    %50 = tpu.matmul %49, %30, %cst_21 {dimension_numbers = #tpu.dot_dimension_numbers<[1], [0], [0], [1], [0, 0, 1, 1], [], []>} : vector<8x32xf32>, vector<32x128xf32>, vector<8x128xf32> -> vector<8x128xf32>
    %51 = vector.broadcast %31 : vector<1x128xf32> to vector<8x128xf32>
    %52 = arith.addf %50, %51 : vector<8x128xf32>
    %53 = vector.extract_strided_slice %52 {offsets = [0, 0], sizes = [8, 32], strides = [1, 1]} : vector<8x128xf32> to vector<8x32xf32>
    %c128 = arith.constant 128 : index
    %c0_22 = arith.constant 0 : index
    %54 = vector.load %arg1[%c128, %c0_22] : memref<160x128xf32, #tpu.memory_space<vmem>>, vector<32x128xf32>
    %cst_23 = arith.constant dense<0.000000e+00> : vector<8x128xf32>
    %55 = tpu.matmul %53, %54, %cst_23 {dimension_numbers = #tpu.dot_dimension_numbers<[1], [0], [0], [1], [0, 0, 1, 1], [], []>} : vector<8x32xf32>, vector<32x128xf32>, vector<8x128xf32> -> vector<8x128xf32>
    %c4 = arith.constant 4 : index
    %c0_24 = arith.constant 0 : index
    %56 = vector.load %arg2[%c4, %c0_24] : memref<5x128xf32, #tpu.memory_space<vmem>>, vector<1x128xf32>
    %57 = vector.broadcast %56 : vector<1x128xf32> to vector<8x128xf32>
    %58 = arith.addf %55, %57 : vector<8x128xf32>
    %c0_25 = arith.constant 0 : index
    %c0_26 = arith.constant 0 : index
    %59 = vector.load %arg3[%c0_25, %c0_26] : memref<8x128xf32, #tpu.memory_space<vmem>>, vector<8x128xf32>
    tpu.vector_store %arg3[%c0_25, %c0_26], %58 {strides = array<i32>} : memref<8x128xf32, #tpu.memory_space<vmem>>, vector<8x128xf32>,
    return
  }
}

</mosaic_0001>

<llo_original>
// kernel: tpu_custom_call.1
$region0: #{tpu_custom_call.1}
  #allocation0 [shape = 'u32[]', space=smem, size = 0x4, offset = 0x4, fixed_abs, tag = 'smem constant byte address 0x4 - core index']
  #allocation1 [shape = 'u32[144,128]{1,0:T(1,128)}', space=vmem, size = 0x12000, scoped, tag = 'internal scratch']
  %s0 = inlined_call_operand.hbm [shape: f32[8,32], index: 0, kind: input, shape index: {}]
  %s1 = inlined_call_operand.hbm [shape: f32[160,128], index: 1, kind: input, shape index: {}]
  %s2 = inlined_call_operand.hbm [shape: f32[5,128], index: 2, kind: input, shape index: {}]
  %s3 = inlined_call_operand.hbm [shape: f32[8,128], index: 3, kind: output, shape index: {}]
  %s4 = sld [smem:[#allocation0]]
  $region34: #{tpu_custom_call.1} parent=0
    _
  %s6 = ssub.s32 1, %s4
  %s7 = scalar_select 0, %s6, %s4
  $region1: #{tpu_custom_call.1} parent=0
    #allocation2 [shape = 'u8[4096]{0}', space=vmem, size = 0x1000, scoped, tag = 'input window, operand 0, single buffered']
    #allocation3 [shape = 's32[1]{0}', space=sflag, size = 0x4, scoped, tag = 'scoped memory for tpu_custom_call.1']
    #allocation4 [shape = 's32[1]{0}', space=sflag, size = 0x4, scoped, tag = 'scoped memory for tpu_custom_call.1']
    #allocation5 [shape = 'u8[81920]{0}', space=vmem, size = 0x14000, scoped, tag = 'input window, operand 1, single buffered']
    #allocation6 [shape = 's32[1]{0}', space=sflag, size = 0x4, scoped, tag = 'scoped memory for tpu_custom_call.1']
    #allocation7 [shape = 'u8[4096]{0}', space=vmem, size = 0x1000, scoped, tag = 'input window, operand 2, single buffered']
    #allocation8 [shape = 'u8[4096]{0}', space=vmem, size = 0x1000, scoped, tag = 'output window, operand 0, single buffered']
    %8 = vsyncpa [#allocation3], 0
    %9 = vsyncpa [#allocation6], 0
    %10 = vsyncpa [#allocation4], 0
    // Predicated region
    $region2: #{tpu_custom_call.1} parent=1 // pred_check
      _
    $region3: #{tpu_custom_call.1} parent=1 // pred_check_branch
      %12 = sbr.rel (0) target = $region5
    $region4: #{tpu_custom_call.1} parent=1 // pred_region
      %s14 = ssub.s32 128, 128
      %15 = vsyncadd [#allocation3], %s14
      %s17 = sshll.u32 [#allocation2], 4
      %s18 = int_to_ptr.vmem [resolvable:$true] %s17
      %20 = dma.hbm_to_vmem [thread:$0]  %s0, 128, %s18, [#allocation3]
    $region5: #{tpu_custom_call.1} parent=1 // pred_fallthru
      _
    // Predicated region
    $region6: #{tpu_custom_call.1} parent=1 // pred_check
      _
    $region7: #{tpu_custom_call.1} parent=1 // pred_check_branch
      %22 = sbr.rel (0) target = $region9
    $region8: #{tpu_custom_call.1} parent=1 // pred_region
      %s24 = ssub.s32 2560, 2560
      %25 = vsyncadd [#allocation6], %s24
      %s26 = sshll.u32 [#allocation5], 4
      %s27 = int_to_ptr.vmem [resolvable:$true] %s26
      %32 = dma.hbm_to_vmem [thread:$0]  %s1, 2560, %s27, [#allocation6], 128, 128, 8
    $region9: #{tpu_custom_call.1} parent=1 // pred_fallthru
      _
    // Predicated region
    $region10: #{tpu_custom_call.1} parent=1 // pred_check
      _
    $region11: #{tpu_custom_call.1} parent=1 // pred_check_branch
      %34 = sbr.rel (0) target = $region13
    $region12: #{tpu_custom_call.1} parent=1 // pred_region
      %s36 = ssub.s32 128, 128
      %37 = vsyncadd [#allocation6], %s36
      %s39 = sshll.u32 [#allocation7], 4
      %s40 = int_to_ptr.vmem [resolvable:$true] %s39
      %42 = dma.hbm_to_vmem [thread:$0]  %s2, 128, %s40, [#allocation6]
    $region13: #{tpu_custom_call.1} parent=1 // pred_fallthru
      _
    // Predicated region
    $region14: #{tpu_custom_call.1} parent=1 // pred_check
      _
    $region15: #{tpu_custom_call.1} parent=1 // pred_check_branch
      %44 = sbr.rel (0) target = $region17
    $region16: #{tpu_custom_call.1} parent=1 // pred_region
      %45 = dma.done [#allocation3], 128
    $region17: #{tpu_custom_call.1} parent=1 // pred_fallthru
      _
    // Predicated region
    $region18: #{tpu_custom_call.1} parent=1 // pred_check
      _
    $region19: #{tpu_custom_call.1} parent=1 // pred_check_branch
      %47 = sbr.rel (0) target = $region21
    $region20: #{tpu_custom_call.1} parent=1 // pred_region
      %48 = dma.done [#allocation6], 2560
    $region21: #{tpu_custom_call.1} parent=1 // pred_fallthru
      _
    // Predicated region
    $region22: #{tpu_custom_call.1} parent=1 // pred_check
      _
    $region23: #{tpu_custom_call.1} parent=1 // pred_check_branch
      %50 = sbr.rel (0) target = $region25
    $region24: #{tpu_custom_call.1} parent=1 // pred_region
      %51 = dma.done [#allocation6], 128
    $region25: #{tpu_custom_call.1} parent=1 // pred_fallthru
      _
    %v52 = vld [vmem:[#allocation2] sm:$0xff]
    %v53 = vld [vmem:[#allocation5] sm:$0xff]
    %v54 = vld [vmem:[#allocation5 + $0x8] sm:$0xff]
    %v55 = vld [vmem:[#allocation5 + $0x10] sm:$0xff]
    %v56 = vld [vmem:[#allocation5 + $0x18] sm:$0xff]
    %v57 = vld [vmem:[#allocation7] sm:$0x1]
    %v58 = vld [vmem:[#allocation5 + $0x20] sm:$0xff]
    %v59 = vld [vmem:[#allocation5 + $0x28] sm:$0xff]
    %v60 = vld [vmem:[#allocation5 + $0x30] sm:$0xff]
    %v61 = vld [vmem:[#allocation5 + $0x38] sm:$0xff]
    %v62 = vld [vmem:[#allocation7 + $0x1] sm:$0x1]
    %v63 = vlaneseq
    %v64 = vshrl.u32 %v63, 7
    %v65 = vsub.s32 0, %v64
    %v66 = vrot.slane %v57, %v65
    %vm67 = vcmask 261120
    %v69 = vsel %vm67, %v52, 0
    %71 = vmatprep.subr.mxu0 0.0
    %72 = vmatpush1.msra.mxu0 0.0
    %73 = vmatprep.subr.mxu0 0.0
    %74 = vmatpush1.msra.mxu0 0.0
    %75 = vmatprep.subr.mxu0 0.0
    %76 = vmatpush1.msra.mxu0 0.0
    %77 = vmatprep.subr.mxu0 0.0
    %78 = vmatpush1.msra.mxu0 0.0
    %79 = vmatprep.subr.mxu0 0.0
    %80 = vmatpush1.msra.mxu0 0.0
    %81 = vmatprep.subr.mxu0 0.0
    %82 = vmatpush1.msra.mxu0 0.0
    %83 = vmatprep.subr.mxu0 0.0
    %84 = vmatpush1.msra.mxu0 0.0
    %85 = vmatprep.subr.mxu0 0.0
    %86 = vmatpush1.msra.mxu0 0.0
    %87 = vmatprep.subr.mxu0 0.0
    %88 = vmatpush1.msra.mxu0 0.0
    %89 = vmatprep.subr.mxu0 0.0
    %90 = vmatpush1.msra.mxu0 0.0
    %91 = vmatprep.subr.mxu0 0.0
    %92 = vmatpush1.msra.mxu0 0.0
    %93 = vmatprep.subr.mxu0 0.0
    %94 = vmatpush1.msra.mxu0 0.0
    %95 = vmatprep.subr.mxu0 0.0
    %96 = vmatpush1.msra.mxu0 %v56
    %97 = vmatprep.subr.mxu0 0.0
    %98 = vmatpush1.msra.mxu0 %v55
    %99 = vmatprep.subr.mxu0 0.0
    %100 = vmatpush1.msra.mxu0 %v54
    %101 = vmatprep.subr.mxu0 0.0
    %102 = vmatpush1.msra.mxu0 %v53
    %103 = vmatprep.subr.mxu0 0.0
    %104 = vmatpush2.msra.mxu0 0.0
    %105 = vmatprep.subr.mxu0 0.0
    %106 = vmatpush2.msra.mxu0 0.0
    %107 = vmatprep.subr.mxu0 0.0
    %108 = vmatpush2.msra.mxu0 0.0
    %109 = vmatprep.subr.mxu0 0.0
    %110 = vmatpush2.msra.mxu0 0.0
    %111 = vmatprep.subr.mxu0 0.0
    %112 = vmatpush2.msra.mxu0 0.0
    %113 = vmatprep.subr.mxu0 0.0
    %114 = vmatpush2.msra.mxu0 0.0
    %115 = vmatprep.subr.mxu0 0.0
    %116 = vmatpush2.msra.mxu0 0.0
    %117 = vmatprep.subr.mxu0 0.0
    %118 = vmatpush2.msra.mxu0 0.0
    %119 = vmatprep.subr.mxu0 0.0
    %120 = vmatpush2.msra.mxu0 0.0
    %121 = vmatprep.subr.mxu0 0.0
    %122 = vmatpush2.msra.mxu0 0.0
    %123 = vmatprep.subr.mxu0 0.0
    %124 = vmatpush2.msra.mxu0 0.0
    %125 = vmatprep.subr.mxu0 0.0
    %126 = vmatpush2.msra.mxu0 0.0
    %127 = vmatprep.subr.mxu0 0.0
    %128 = vmatpush2.msra.mxu0 0.0
    %129 = vmatprep.subr.mxu0 0.0
    %130 = vmatpush2.msra.mxu0 0.0
    %131 = vmatprep.subr.mxu0 0.0
    %132 = vmatpush2.msra.mxu0 0.0
    %133 = vmatprep.subr.mxu0 0.0
    %134 = vmatpush2.msra.mxu0 0.0
    %135 = vmatprep.mubr.f32.mxu0 0.0
    %136 = vmatmul.mubr.f32.gmra.mxu0 %v69
    %v137 = vpop.f32.mrf.mxu0
    %v138 = vadd.f32 %v66, %v137
    %v139 = vpop.f32.mrf.mxu0
    %140 = vdwg.mxu0
    %142 = vrot.lane.b32.xlu0 %v138, 96
    %v143 = vpop.permute.xlu0 %142
    %v144 = vsel %vm67, %v138, 0
    %v146 = vsel %vm67, %v143, 0
    %148 = vmatprep.subr.mxu0 0.0
    %149 = vmatpush1.xpose.msra.mxu0 0.0
    %150 = vmatprep.subr.mxu0 0.0
    %151 = vmatpush1.xpose.msra.mxu0 0.0
    %152 = vmatprep.subr.mxu0 0.0
    %153 = vmatpush1.xpose.msra.mxu0 0.0
    %154 = vmatprep.subr.mxu0 0.0
    %155 = vmatpush1.xpose.msra.mxu0 0.0
    %156 = vmatprep.subr.mxu0 0.0
    %157 = vmatpush1.xpose.msra.mxu0 0.0
    %158 = vmatprep.subr.mxu0 0.0
    %159 = vmatpush1.xpose.msra.mxu0 0.0
    %160 = vmatprep.subr.mxu0 0.0
    %161 = vmatpush1.xpose.msra.mxu0 0.0
    %162 = vmatprep.subr.mxu0 0.0
    %163 = vmatpush1.xpose.msra.mxu0 0.0
    %164 = vmatprep.subr.mxu0 0.0
    %165 = vmatpush1.xpose.msra.mxu0 0.0
    %166 = vmatprep.subr.mxu0 0.0
    %167 = vmatpush1.xpose.msra.mxu0 0.0
    %168 = vmatprep.subr.mxu0 0.0
    %169 = vmatpush1.xpose.msra.mxu0 0.0
    %170 = vmatprep.subr.mxu0 0.0
    %171 = vmatpush1.xpose.msra.mxu0 0.0
    %172 = vmatprep.subr.mxu0 0.0
    %173 = vmatpush1.xpose.msra.mxu0 0.0
    %174 = vmatprep.subr.mxu0 0.0
    %175 = vmatpush1.xpose.msra.mxu0 0.0
    %176 = vmatprep.subr.mxu0 0.0
    %177 = vmatpush1.xpose.msra.mxu0 0.0
    %178 = vmatprep.subr.mxu0 0.0
    %179 = vmatpush1.xpose.msra.mxu0 %v146
    %180 = vmatprep.subr.mxu0 0.0
    %181 = vmatpush2.xpose.msra.mxu0 0.0
    %182 = vmatprep.subr.mxu0 0.0
    %183 = vmatpush2.xpose.msra.mxu0 0.0
    %184 = vmatprep.subr.mxu0 0.0
    %185 = vmatpush2.xpose.msra.mxu0 0.0
    %186 = vmatprep.subr.mxu0 0.0
    %187 = vmatpush2.xpose.msra.mxu0 0.0
    %188 = vmatprep.subr.mxu0 0.0
    %189 = vmatpush2.xpose.msra.mxu0 0.0
    %190 = vmatprep.subr.mxu0 0.0
    %191 = vmatpush2.xpose.msra.mxu0 0.0
    %192 = vmatprep.subr.mxu0 0.0
    %193 = vmatpush2.xpose.msra.mxu0 0.0
    %194 = vmatprep.subr.mxu0 0.0
    %195 = vmatpush2.xpose.msra.mxu0 0.0
    %196 = vmatprep.subr.mxu0 0.0
    %197 = vmatpush2.xpose.msra.mxu0 0.0
    %198 = vmatprep.subr.mxu0 0.0
    %199 = vmatpush2.xpose.msra.mxu0 0.0
    %200 = vmatprep.subr.mxu0 0.0
    %201 = vmatpush2.xpose.msra.mxu0 0.0
    %202 = vmatprep.subr.mxu0 0.0
    %203 = vmatpush2.xpose.msra.mxu0 0.0
    %204 = vmatprep.subr.mxu0 0.0
    %205 = vmatpush2.xpose.msra.mxu0 0.0
    %206 = vmatprep.subr.mxu0 0.0
    %207 = vmatpush2.xpose.msra.mxu0 0.0
    %208 = vmatprep.subr.mxu0 0.0
    %209 = vmatpush2.xpose.msra.mxu0 0.0
    %210 = vmatprep.subr.mxu0 0.0
    %211 = vmatpush2.xpose.msra.mxu0 0.0
    %212 = vmatprep.mubr.f32.mxu0 0.0
    %213 = vmatmul.mubr.f32.gmra.mxu0 %v144
    %v214 = vpop.f32.mrf.mxu0
    %v215 = vadd.f32 0.0, %v214
    %v216 = vpop.f32.mrf.mxu0
    %217 = vdwg.mxu0
    %vm218 = vcmask 64512
    %v219 = vsel %vm218, %v215, -inf
    %220 = vmax.xlane.f32.xlu0 %v219
    %v221 = vpop.xlane.xlu0 %220
    %v222 = vsub.f32 %v215, %v221
    %v223 = vmul.f32 %v222, 1.442695
    %v224 = vpow.pop %v223
    %v225 = vsel %vm218, %v224, 0.0
    %226 = vadd.xlane.f32.xlu0 %v225
    %v227 = vpop.xlane.xlu0 %226
    %v228 = vrcp.pop %v227
    %v229 = vmul.f32 %v224, %v228
    %230 = vrot.lane.b32.xlu0 %v138, 64
    %v231 = vpop.permute.xlu0 %230
    %v234 = vsel %vm218, %v229, 0
    %236 = vmatprep.subr.mxu0 0.0
    %237 = vmatpush1.msra.mxu0 0.0
    %238 = vmatprep.subr.mxu0 0.0
    %239 = vmatpush1.msra.mxu0 0.0
    %240 = vmatprep.subr.mxu0 0.0
    %241 = vmatpush1.msra.mxu0 0.0
    %242 = vmatprep.subr.mxu0 0.0
    %243 = vmatpush1.msra.mxu0 0.0
    %244 = vmatprep.subr.mxu0 0.0
    %245 = vmatpush1.msra.mxu0 0.0
    %246 = vmatprep.subr.mxu0 0.0
    %247 = vmatpush1.msra.mxu0 0.0
    %248 = vmatprep.subr.mxu0 0.0
    %249 = vmatpush1.msra.mxu0 0.0
    %250 = vmatprep.subr.mxu0 0.0
    %251 = vmatpush1.msra.mxu0 0.0
    %252 = vmatprep.subr.mxu0 0.0
    %253 = vmatpush1.msra.mxu0 0.0
    %254 = vmatprep.subr.mxu0 0.0
    %255 = vmatpush1.msra.mxu0 0.0
    %256 = vmatprep.subr.mxu0 0.0
    %257 = vmatpush1.msra.mxu0 0.0
    %258 = vmatprep.subr.mxu0 0.0
    %259 = vmatpush1.msra.mxu0 0.0
    %260 = vmatprep.subr.mxu0 0.0
    %261 = vmatpush1.msra.mxu0 0.0
    %262 = vmatprep.subr.mxu0 0.0
    %263 = vmatpush1.msra.mxu0 0.0
    %264 = vmatprep.subr.mxu0 0.0
    %265 = vmatpush1.msra.mxu0 0.0
    %266 = vmatprep.subr.mxu0 0.0
    %267 = vmatpush1.msra.mxu0 %v231
    %268 = vmatprep.subr.mxu0 0.0
    %269 = vmatpush2.msra.mxu0 0.0
    %270 = vmatprep.subr.mxu0 0.0
    %271 = vmatpush2.msra.mxu0 0.0
    %272 = vmatprep.subr.mxu0 0.0
    %273 = vmatpush2.msra.mxu0 0.0
    %274 = vmatprep.subr.mxu0 0.0
    %275 = vmatpush2.msra.mxu0 0.0
    %276 = vmatprep.subr.mxu0 0.0
    %277 = vmatpush2.msra.mxu0 0.0
    %278 = vmatprep.subr.mxu0 0.0
    %279 = vmatpush2.msra.mxu0 0.0
    %280 = vmatprep.subr.mxu0 0.0
    %281 = vmatpush2.msra.mxu0 0.0
    %282 = vmatprep.subr.mxu0 0.0
    %283 = vmatpush2.msra.mxu0 0.0
    %284 = vmatprep.subr.mxu0 0.0
    %285 = vmatpush2.msra.mxu0 0.0
    %286 = vmatprep.subr.mxu0 0.0
    %287 = vmatpush2.msra.mxu0 0.0
    %288 = vmatprep.subr.mxu0 0.0
    %289 = vmatpush2.msra.mxu0 0.0
    %290 = vmatprep.subr.mxu0 0.0
    %291 = vmatpush2.msra.mxu0 0.0
    %292 = vmatprep.subr.mxu0 0.0
    %293 = vmatpush2.msra.mxu0 0.0
    %294 = vmatprep.subr.mxu0 0.0
    %295 = vmatpush2.msra.mxu0 0.0
    %296 = vmatprep.subr.mxu0 0.0
    %297 = vmatpush2.msra.mxu0 0.0
    %298 = vmatprep.subr.mxu0 0.0
    %299 = vmatpush2.msra.mxu0 0.0
    %300 = vmatprep.mubr.f32.mxu0 0.0
    %301 = vmatmul.mubr.f32.gmra.mxu0 %v234
    %v302 = vpop.f32.mrf.mxu0
    %v303 = vadd.f32 0.0, %v302
    %v304 = vpop.f32.mrf.mxu0
    %305 = vdwg.mxu0
    %v306 = vlaneseq
    %v307 = vshrl.u32 %v306, 7
    %v308 = vsub.s32 0, %v307
    %v309 = vrot.slane %v62, %v308
    %v311 = vsel %vm67, %v303, 0
    %313 = vmatprep.subr.mxu0 0.0
    %314 = vmatpush1.msra.mxu0 0.0
    %315 = vmatprep.subr.mxu0 0.0
    %316 = vmatpush1.msra.mxu0 0.0
    %317 = vmatprep.subr.mxu0 0.0
    %318 = vmatpush1.msra.mxu0 0.0
    %319 = vmatprep.subr.mxu0 0.0
    %320 = vmatpush1.msra.mxu0 0.0
    %321 = vmatprep.subr.mxu0 0.0
    %322 = vmatpush1.msra.mxu0 0.0
    %323 = vmatprep.subr.mxu0 0.0
    %324 = vmatpush1.msra.mxu0 0.0
    %325 = vmatprep.subr.mxu0 0.0
    %326 = vmatpush1.msra.mxu0 0.0
    %327 = vmatprep.subr.mxu0 0.0
    %328 = vmatpush1.msra.mxu0 0.0
    %329 = vmatprep.subr.mxu0 0.0
    %330 = vmatpush1.msra.mxu0 0.0
    %331 = vmatprep.subr.mxu0 0.0
    %332 = vmatpush1.msra.mxu0 0.0
    %333 = vmatprep.subr.mxu0 0.0
    %334 = vmatpush1.msra.mxu0 0.0
    %335 = vmatprep.subr.mxu0 0.0
    %336 = vmatpush1.msra.mxu0 0.0
    %337 = vmatprep.subr.mxu0 0.0
    %338 = vmatpush1.msra.mxu0 %v61
    %339 = vmatprep.subr.mxu0 0.0
    %340 = vmatpush1.msra.mxu0 %v60
    %341 = vmatprep.subr.mxu0 0.0
    %342 = vmatpush1.msra.mxu0 %v59
    %343 = vmatprep.subr.mxu0 0.0
    %344 = vmatpush1.msra.mxu0 %v58
    %345 = vmatprep.subr.mxu0 0.0
    %346 = vmatpush2.msra.mxu0 0.0
    %347 = vmatprep.subr.mxu0 0.0
    %348 = vmatpush2.msra.mxu0 0.0
    %349 = vmatprep.subr.mxu0 0.0
    %350 = vmatpush2.msra.mxu0 0.0
    %351 = vmatprep.subr.mxu0 0.0
    %352 = vmatpush2.msra.mxu0 0.0
    %353 = vmatprep.subr.mxu0 0.0
    %354 = vmatpush2.msra.mxu0 0.0
    %355 = vmatprep.subr.mxu0 0.0
    %356 = vmatpush2.msra.mxu0 0.0
    %357 = vmatprep.subr.mxu0 0.0
    %358 = vmatpush2.msra.mxu0 0.0
    %359 = vmatprep.subr.mxu0 0.0
    %360 = vmatpush2.msra.mxu0 0.0
    %361 = vmatprep.subr.mxu0 0.0
    %362 = vmatpush2.msra.mxu0 0.0
    %363 = vmatprep.subr.mxu0 0.0
    %364 = vmatpush2.msra.mxu0 0.0
    %365 = vmatprep.subr.mxu0 0.0
    %366 = vmatpush2.msra.mxu0 0.0
    %367 = vmatprep.subr.mxu0 0.0
    %368 = vmatpush2.msra.mxu0 0.0
    %369 = vmatprep.subr.mxu0 0.0
    %370 = vmatpush2.msra.mxu0 0.0
    %371 = vmatprep.subr.mxu0 0.0
    %372 = vmatpush2.msra.mxu0 0.0
    %373 = vmatprep.subr.mxu0 0.0
    %374 = vmatpush2.msra.mxu0 0.0
    %375 = vmatprep.subr.mxu0 0.0
    %376 = vmatpush2.msra.mxu0 0.0
    %377 = vmatprep.mubr.f32.mxu0 0.0
    %378 = vmatmul.mubr.f32.gmra.mxu0 %v311
    %v379 = vpop.f32.mrf.mxu0
    %v380 = vadd.f32 %v309, %v379
    %v381 = vpop.f32.mrf.mxu0
    %382 = vdwg.mxu0
    %v383 = vadd.f32 %v52, %v380
    %v384 = vld [vmem:[#allocation5 + $0x40] sm:$0xff]
    %v385 = vld [vmem:[#allocation5 + $0x48] sm:$0xff]
    %v386 = vld [vmem:[#allocation5 + $0x50] sm:$0xff]
    %v387 = vld [vmem:[#allocation5 + $0x58] sm:$0xff]
    %v388 = vld [vmem:[#allocation7 + $0x2] sm:$0x1]
    %v389 = vld [vmem:[#allocation5 + $0x60] sm:$0xff]
    %v390 = vld [vmem:[#allocation5 + $0x68] sm:$0xff]
    %v391 = vld [vmem:[#allocation5 + $0x70] sm:$0xff]
    %v392 = vld [vmem:[#allocation5 + $0x78] sm:$0xff]
    %v393 = vld [vmem:[#allocation7 + $0x3] sm:$0x1]
    %v394 = vlaneseq
    %v395 = vshrl.u32 %v394, 7
    %v396 = vsub.s32 0, %v395
    %v397 = vrot.slane %v388, %v396
    %v399 = vsel %vm67, %v383, 0
    %401 = vmatprep.subr.mxu0 0.0
    %402 = vmatpush1.msra.mxu0 0.0
    %403 = vmatprep.subr.mxu0 0.0
    %404 = vmatpush1.msra.mxu0 0.0
    %405 = vmatprep.subr.mxu0 0.0
    %406 = vmatpush1.msra.mxu0 0.0
    %407 = vmatprep.subr.mxu0 0.0
    %408 = vmatpush1.msra.mxu0 0.0
    %409 = vmatprep.subr.mxu0 0.0
    %410 = vmatpush1.msra.mxu0 0.0
    %411 = vmatprep.subr.mxu0 0.0
    %412 = vmatpush1.msra.mxu0 0.0
    %413 = vmatprep.subr.mxu0 0.0
    %414 = vmatpush1.msra.mxu0 0.0
    %415 = vmatprep.subr.mxu0 0.0
    %416 = vmatpush1.msra.mxu0 0.0
    %417 = vmatprep.subr.mxu0 0.0
    %418 = vmatpush1.msra.mxu0 0.0
    %419 = vmatprep.subr.mxu0 0.0
    %420 = vmatpush1.msra.mxu0 0.0
    %421 = vmatprep.subr.mxu0 0.0
    %422 = vmatpush1.msra.mxu0 0.0
    %423 = vmatprep.subr.mxu0 0.0
    %424 = vmatpush1.msra.mxu0 0.0
    %425 = vmatprep.subr.mxu0 0.0
    %426 = vmatpush1.msra.mxu0 %v387
    %427 = vmatprep.subr.mxu0 0.0
    %428 = vmatpush1.msra.mxu0 %v386
    %429 = vmatprep.subr.mxu0 0.0
    %430 = vmatpush1.msra.mxu0 %v385
    %431 = vmatprep.subr.mxu0 0.0
    %432 = vmatpush1.msra.mxu0 %v384
    %433 = vmatprep.subr.mxu0 0.0
    %434 = vmatpush2.msra.mxu0 0.0
    %435 = vmatprep.subr.mxu0 0.0
    %436 = vmatpush2.msra.mxu0 0.0
    %437 = vmatprep.subr.mxu0 0.0
    %438 = vmatpush2.msra.mxu0 0.0
    %439 = vmatprep.subr.mxu0 0.0
    %440 = vmatpush2.msra.mxu0 0.0
    %441 = vmatprep.subr.mxu0 0.0
    %442 = vmatpush2.msra.mxu0 0.0
    %443 = vmatprep.subr.mxu0 0.0
    %444 = vmatpush2.msra.mxu0 0.0
    %445 = vmatprep.subr.mxu0 0.0
    %446 = vmatpush2.msra.mxu0 0.0
    %447 = vmatprep.subr.mxu0 0.0
    %448 = vmatpush2.msra.mxu0 0.0
    %449 = vmatprep.subr.mxu0 0.0
    %450 = vmatpush2.msra.mxu0 0.0
    %451 = vmatprep.subr.mxu0 0.0
    %452 = vmatpush2.msra.mxu0 0.0
    %453 = vmatprep.subr.mxu0 0.0
    %454 = vmatpush2.msra.mxu0 0.0
    %455 = vmatprep.subr.mxu0 0.0
    %456 = vmatpush2.msra.mxu0 0.0
    %457 = vmatprep.subr.mxu0 0.0
    %458 = vmatpush2.msra.mxu0 0.0
    %459 = vmatprep.subr.mxu0 0.0
    %460 = vmatpush2.msra.mxu0 0.0
    %461 = vmatprep.subr.mxu0 0.0
    %462 = vmatpush2.msra.mxu0 0.0
    %463 = vmatprep.subr.mxu0 0.0
    %464 = vmatpush2.msra.mxu0 0.0
    %465 = vmatprep.mubr.f32.mxu0 0.0
    %466 = vmatmul.mubr.f32.gmra.mxu0 %v399
    %v467 = vpop.f32.mrf.mxu0
    %v468 = vadd.f32 %v397, %v467
    %v469 = vpop.f32.mrf.mxu0
    %470 = vdwg.mxu0
    %472 = vrot.lane.b32.xlu0 %v468, 96
    %v473 = vpop.permute.xlu0 %472
    %v474 = vsel %vm67, %v468, 0
    %v476 = vsel %vm67, %v473, 0
    %478 = vmatprep.subr.mxu0 0.0
    %479 = vmatpush1.xpose.msra.mxu0 0.0
    %480 = vmatprep.subr.mxu0 0.0
    %481 = vmatpush1.xpose.msra.mxu0 0.0
    %482 = vmatprep.subr.mxu0 0.0
    %483 = vmatpush1.xpose.msra.mxu0 0.0
    %484 = vmatprep.subr.mxu0 0.0
    %485 = vmatpush1.xpose.msra.mxu0 0.0
    %486 = vmatprep.subr.mxu0 0.0
    %487 = vmatpush1.xpose.msra.mxu0 0.0
    %488 = vmatprep.subr.mxu0 0.0
    %489 = vmatpush1.xpose.msra.mxu0 0.0
    %490 = vmatprep.subr.mxu0 0.0
    %491 = vmatpush1.xpose.msra.mxu0 0.0
    %492 = vmatprep.subr.mxu0 0.0
    %493 = vmatpush1.xpose.msra.mxu0 0.0
    %494 = vmatprep.subr.mxu0 0.0
    %495 = vmatpush1.xpose.msra.mxu0 0.0
    %496 = vmatprep.subr.mxu0 0.0
    %497 = vmatpush1.xpose.msra.mxu0 0.0
    %498 = vmatprep.subr.mxu0 0.0
    %499 = vmatpush1.xpose.msra.mxu0 0.0
    %500 = vmatprep.subr.mxu0 0.0
    %501 = vmatpush1.xpose.msra.mxu0 0.0
    %502 = vmatprep.subr.mxu0 0.0
    %503 = vmatpush1.xpose.msra.mxu0 0.0
    %504 = vmatprep.subr.mxu0 0.0
    %505 = vmatpush1.xpose.msra.mxu0 0.0
    %506 = vmatprep.subr.mxu0 0.0
    %507 = vmatpush1.xpose.msra.mxu0 0.0
    %508 = vmatprep.subr.mxu0 0.0
    %509 = vmatpush1.xpose.msra.mxu0 %v476
    %510 = vmatprep.subr.mxu0 0.0
    %511 = vmatpush2.xpose.msra.mxu0 0.0
    %512 = vmatprep.subr.mxu0 0.0
    %513 = vmatpush2.xpose.msra.mxu0 0.0
    %514 = vmatprep.subr.mxu0 0.0
    %515 = vmatpush2.xpose.msra.mxu0 0.0
    %516 = vmatprep.subr.mxu0 0.0
    %517 = vmatpush2.xpose.msra.mxu0 0.0
    %518 = vmatprep.subr.mxu0 0.0
    %519 = vmatpush2.xpose.msra.mxu0 0.0
    %520 = vmatprep.subr.mxu0 0.0
    %521 = vmatpush2.xpose.msra.mxu0 0.0
    %522 = vmatprep.subr.mxu0 0.0
    %523 = vmatpush2.xpose.msra.mxu0 0.0
    %524 = vmatprep.subr.mxu0 0.0
    %525 = vmatpush2.xpose.msra.mxu0 0.0
    %526 = vmatprep.subr.mxu0 0.0
    %527 = vmatpush2.xpose.msra.mxu0 0.0
    %528 = vmatprep.subr.mxu0 0.0
    %529 = vmatpush2.xpose.msra.mxu0 0.0
    %530 = vmatprep.subr.mxu0 0.0
    %531 = vmatpush2.xpose.msra.mxu0 0.0
    %532 = vmatprep.subr.mxu0 0.0
    %533 = vmatpush2.xpose.msra.mxu0 0.0
    %534 = vmatprep.subr.mxu0 0.0
    %535 = vmatpush2.xpose.msra.mxu0 0.0
    %536 = vmatprep.subr.mxu0 0.0
    %537 = vmatpush2.xpose.msra.mxu0 0.0
    %538 = vmatprep.subr.mxu0 0.0
    %539 = vmatpush2.xpose.msra.mxu0 0.0
    %540 = vmatprep.subr.mxu0 0.0
    %541 = vmatpush2.xpose.msra.mxu0 0.0
    %542 = vmatprep.mubr.f32.mxu0 0.0
    %543 = vmatmul.mubr.f32.gmra.mxu0 %v474
    %v544 = vpop.f32.mrf.mxu0
    %v545 = vadd.f32 0.0, %v544
    %v546 = vpop.f32.mrf.mxu0
    %547 = vdwg.mxu0
    %v548 = vsel %vm218, %v545, -inf
    %549 = vmax.xlane.f32.xlu0 %v548
    %v550 = vpop.xlane.xlu0 %549
    %v551 = vsub.f32 %v545, %v550
    %v552 = vmul.f32 %v551, 1.442695
    %v553 = vpow.pop %v552
    %v554 = vsel %vm218, %v553, 0.0
    %555 = vadd.xlane.f32.xlu0 %v554
    %v556 = vpop.xlane.xlu0 %555
    %v557 = vrcp.pop %v556
    %v558 = vmul.f32 %v553, %v557
    %559 = vrot.lane.b32.xlu0 %v468, 64
    %v560 = vpop.permute.xlu0 %559
    %v563 = vsel %vm218, %v558, 0
    %565 = vmatprep.subr.mxu0 0.0
    %566 = vmatpush1.msra.mxu0 0.0
    %567 = vmatprep.subr.mxu0 0.0
    %568 = vmatpush1.msra.mxu0 0.0
    %569 = vmatprep.subr.mxu0 0.0
    %570 = vmatpush1.msra.mxu0 0.0
    %571 = vmatprep.subr.mxu0 0.0
    %572 = vmatpush1.msra.mxu0 0.0
    %573 = vmatprep.subr.mxu0 0.0
    %574 = vmatpush1.msra.mxu0 0.0
    %575 = vmatprep.subr.mxu0 0.0
    %576 = vmatpush1.msra.mxu0 0.0
    %577 = vmatprep.subr.mxu0 0.0
    %578 = vmatpush1.msra.mxu0 0.0
    %579 = vmatprep.subr.mxu0 0.0
    %580 = vmatpush1.msra.mxu0 0.0
    %581 = vmatprep.subr.mxu0 0.0
    %582 = vmatpush1.msra.mxu0 0.0
    %583 = vmatprep.subr.mxu0 0.0
    %584 = vmatpush1.msra.mxu0 0.0
    %585 = vmatprep.subr.mxu0 0.0
    %586 = vmatpush1.msra.mxu0 0.0
    %587 = vmatprep.subr.mxu0 0.0
    %588 = vmatpush1.msra.mxu0 0.0
    %589 = vmatprep.subr.mxu0 0.0
    %590 = vmatpush1.msra.mxu0 0.0
    %591 = vmatprep.subr.mxu0 0.0
    %592 = vmatpush1.msra.mxu0 0.0
    %593 = vmatprep.subr.mxu0 0.0
    %594 = vmatpush1.msra.mxu0 0.0
    %595 = vmatprep.subr.mxu0 0.0
    %596 = vmatpush1.msra.mxu0 %v560
    %597 = vmatprep.subr.mxu0 0.0
    %598 = vmatpush2.msra.mxu0 0.0
    %599 = vmatprep.subr.mxu0 0.0
    %600 = vmatpush2.msra.mxu0 0.0
    %601 = vmatprep.subr.mxu0 0.0
    %602 = vmatpush2.msra.mxu0 0.0
    %603 = vmatprep.subr.mxu0 0.0
    %604 = vmatpush2.msra.mxu0 0.0
    %605 = vmatprep.subr.mxu0 0.0
    %606 = vmatpush2.msra.mxu0 0.0
    %607 = vmatprep.subr.mxu0 0.0
    %608 = vmatpush2.msra.mxu0 0.0
    %609 = vmatprep.subr.mxu0 0.0
    %610 = vmatpush2.msra.mxu0 0.0
    %611 = vmatprep.subr.mxu0 0.0
    %612 = vmatpush2.msra.mxu0 0.0
    %613 = vmatprep.subr.mxu0 0.0
    %614 = vmatpush2.msra.mxu0 0.0
    %615 = vmatprep.subr.mxu0 0.0
    %616 = vmatpush2.msra.mxu0 0.0
    %617 = vmatprep.subr.mxu0 0.0
    %618 = vmatpush2.msra.mxu0 0.0
    %619 = vmatprep.subr.mxu0 0.0
    %620 = vmatpush2.msra.mxu0 0.0
    %621 = vmatprep.subr.mxu0 0.0
    %622 = vmatpush2.msra.mxu0 0.0
    %623 = vmatprep.subr.mxu0 0.0
    %624 = vmatpush2.msra.mxu0 0.0
    %625 = vmatprep.subr.mxu0 0.0
    %626 = vmatpush2.msra.mxu0 0.0
    %627 = vmatprep.subr.mxu0 0.0
    %628 = vmatpush2.msra.mxu0 0.0
    %629 = vmatprep.mubr.f32.mxu0 0.0
    %630 = vmatmul.mubr.f32.gmra.mxu0 %v563
    %v631 = vpop.f32.mrf.mxu0
    %v632 = vadd.f32 0.0, %v631
    %v633 = vpop.f32.mrf.mxu0
    %634 = vdwg.mxu0
    %v635 = vlaneseq
    %v636 = vshrl.u32 %v635, 7
    %v637 = vsub.s32 0, %v636
    %v638 = vrot.slane %v393, %v637
    %v640 = vsel %vm67, %v632, 0
    %642 = vmatprep.subr.mxu0 0.0
    %643 = vmatpush1.msra.mxu0 0.0
    %644 = vmatprep.subr.mxu0 0.0
    %645 = vmatpush1.msra.mxu0 0.0
    %646 = vmatprep.subr.mxu0 0.0
    %647 = vmatpush1.msra.mxu0 0.0
    %648 = vmatprep.subr.mxu0 0.0
    %649 = vmatpush1.msra.mxu0 0.0
    %650 = vmatprep.subr.mxu0 0.0
    %651 = vmatpush1.msra.mxu0 0.0
    %652 = vmatprep.subr.mxu0 0.0
    %653 = vmatpush1.msra.mxu0 0.0
    %654 = vmatprep.subr.mxu0 0.0
    %655 = vmatpush1.msra.mxu0 0.0
    %656 = vmatprep.subr.mxu0 0.0
    %657 = vmatpush1.msra.mxu0 0.0
    %658 = vmatprep.subr.mxu0 0.0
    %659 = vmatpush1.msra.mxu0 0.0
    %660 = vmatprep.subr.mxu0 0.0
    %661 = vmatpush1.msra.mxu0 0.0
    %662 = vmatprep.subr.mxu0 0.0
    %663 = vmatpush1.msra.mxu0 0.0
    %664 = vmatprep.subr.mxu0 0.0
    %665 = vmatpush1.msra.mxu0 0.0
    %666 = vmatprep.subr.mxu0 0.0
    %667 = vmatpush1.msra.mxu0 %v392
    %668 = vmatprep.subr.mxu0 0.0
    %669 = vmatpush1.msra.mxu0 %v391
    %670 = vmatprep.subr.mxu0 0.0
    %671 = vmatpush1.msra.mxu0 %v390
    %672 = vmatprep.subr.mxu0 0.0
    %673 = vmatpush1.msra.mxu0 %v389
    %674 = vmatprep.subr.mxu0 0.0
    %675 = vmatpush2.msra.mxu0 0.0
    %676 = vmatprep.subr.mxu0 0.0
    %677 = vmatpush2.msra.mxu0 0.0
    %678 = vmatprep.subr.mxu0 0.0
    %679 = vmatpush2.msra.mxu0 0.0
    %680 = vmatprep.subr.mxu0 0.0
    %681 = vmatpush2.msra.mxu0 0.0
    %682 = vmatprep.subr.mxu0 0.0
    %683 = vmatpush2.msra.mxu0 0.0
    %684 = vmatprep.subr.mxu0 0.0
    %685 = vmatpush2.msra.mxu0 0.0
    %686 = vmatprep.subr.mxu0 0.0
    %687 = vmatpush2.msra.mxu0 0.0
    %688 = vmatprep.subr.mxu0 0.0
    %689 = vmatpush2.msra.mxu0 0.0
    %690 = vmatprep.subr.mxu0 0.0
    %691 = vmatpush2.msra.mxu0 0.0
    %692 = vmatprep.subr.mxu0 0.0
    %693 = vmatpush2.msra.mxu0 0.0
    %694 = vmatprep.subr.mxu0 0.0
    %695 = vmatpush2.msra.mxu0 0.0
    %696 = vmatprep.subr.mxu0 0.0
    %697 = vmatpush2.msra.mxu0 0.0
    %698 = vmatprep.subr.mxu0 0.0
    %699 = vmatpush2.msra.mxu0 0.0
    %700 = vmatprep.subr.mxu0 0.0
    %701 = vmatpush2.msra.mxu0 0.0
    %702 = vmatprep.subr.mxu0 0.0
    %703 = vmatpush2.msra.mxu0 0.0
    %704 = vmatprep.subr.mxu0 0.0
    %705 = vmatpush2.msra.mxu0 0.0
    %706 = vmatprep.mubr.f32.mxu0 0.0
    %707 = vmatmul.mubr.f32.gmra.mxu0 %v640
    %v708 = vpop.f32.mrf.mxu0
    %v709 = vadd.f32 %v638, %v708
    %v710 = vpop.f32.mrf.mxu0
    %711 = vdwg.mxu0
    %v712 = vld [vmem:[#allocation5 + $0x80] sm:$0xff]
    %v713 = vld [vmem:[#allocation5 + $0x88] sm:$0xff]
    %v714 = vld [vmem:[#allocation5 + $0x90] sm:$0xff]
    %v715 = vld [vmem:[#allocation5 + $0x98] sm:$0xff]
    %v716 = vld [vmem:[#allocation7 + $0x4] sm:$0x1]
    %v717 = vlaneseq
    %v718 = vshrl.u32 %v717, 7
    %v719 = vsub.s32 0, %v718
    %v720 = vrot.slane %v716, %v719
    %v722 = vsel %vm67, %v709, 0
    %724 = vmatprep.subr.mxu0 0.0
    %725 = vmatpush1.msra.mxu0 0.0
    %726 = vmatprep.subr.mxu0 0.0
    %727 = vmatpush1.msra.mxu0 0.0
    %728 = vmatprep.subr.mxu0 0.0
    %729 = vmatpush1.msra.mxu0 0.0
    %730 = vmatprep.subr.mxu0 0.0
    %731 = vmatpush1.msra.mxu0 0.0
    %732 = vmatprep.subr.mxu0 0.0
    %733 = vmatpush1.msra.mxu0 0.0
    %734 = vmatprep.subr.mxu0 0.0
    %735 = vmatpush1.msra.mxu0 0.0
    %736 = vmatprep.subr.mxu0 0.0
    %737 = vmatpush1.msra.mxu0 0.0
    %738 = vmatprep.subr.mxu0 0.0
    %739 = vmatpush1.msra.mxu0 0.0
    %740 = vmatprep.subr.mxu0 0.0
    %741 = vmatpush1.msra.mxu0 0.0
    %742 = vmatprep.subr.mxu0 0.0
    %743 = vmatpush1.msra.mxu0 0.0
    %744 = vmatprep.subr.mxu0 0.0
    %745 = vmatpush1.msra.mxu0 0.0
    %746 = vmatprep.subr.mxu0 0.0
    %747 = vmatpush1.msra.mxu0 0.0
    %748 = vmatprep.subr.mxu0 0.0
    %749 = vmatpush1.msra.mxu0 %v715
    %750 = vmatprep.subr.mxu0 0.0
    %751 = vmatpush1.msra.mxu0 %v714
    %752 = vmatprep.subr.mxu0 0.0
    %753 = vmatpush1.msra.mxu0 %v713
    %754 = vmatprep.subr.mxu0 0.0
    %755 = vmatpush1.msra.mxu0 %v712
    %756 = vmatprep.subr.mxu0 0.0
    %757 = vmatpush2.msra.mxu0 0.0
    %758 = vmatprep.subr.mxu0 0.0
    %759 = vmatpush2.msra.mxu0 0.0
    %760 = vmatprep.subr.mxu0 0.0
    %761 = vmatpush2.msra.mxu0 0.0
    %762 = vmatprep.subr.mxu0 0.0
    %763 = vmatpush2.msra.mxu0 0.0
    %764 = vmatprep.subr.mxu0 0.0
    %765 = vmatpush2.msra.mxu0 0.0
    %766 = vmatprep.subr.mxu0 0.0
    %767 = vmatpush2.msra.mxu0 0.0
    %768 = vmatprep.subr.mxu0 0.0
    %769 = vmatpush2.msra.mxu0 0.0
    %770 = vmatprep.subr.mxu0 0.0
    %771 = vmatpush2.msra.mxu0 0.0
    %772 = vmatprep.subr.mxu0 0.0
    %773 = vmatpush2.msra.mxu0 0.0
    %774 = vmatprep.subr.mxu0 0.0
    %775 = vmatpush2.msra.mxu0 0.0
    %776 = vmatprep.subr.mxu0 0.0
    %777 = vmatpush2.msra.mxu0 0.0
    %778 = vmatprep.subr.mxu0 0.0
    %779 = vmatpush2.msra.mxu0 0.0
    %780 = vmatprep.subr.mxu0 0.0
    %781 = vmatpush2.msra.mxu0 0.0
    %782 = vmatprep.subr.mxu0 0.0
    %783 = vmatpush2.msra.mxu0 0.0
    %784 = vmatprep.subr.mxu0 0.0
    %785 = vmatpush2.msra.mxu0 0.0
    %786 = vmatprep.subr.mxu0 0.0
    %787 = vmatpush2.msra.mxu0 0.0
    %788 = vmatprep.mubr.f32.mxu0 0.0
    %789 = vmatmul.mubr.f32.gmra.mxu0 %v722
    %v790 = vpop.f32.mrf.mxu0
    %v791 = vadd.f32 %v720, %v790
    %v792 = vpop.f32.mrf.mxu0
    %793 = vdwg.mxu0
    %794 = vst [vmem:[#allocation8] sm:$0xff] %v791
    // Predicated region
    $region26: #{tpu_custom_call.1} parent=1 // pred_check
      _
    $region27: #{tpu_custom_call.1} parent=1 // pred_check_branch
      %796 = sbr.rel (0) target = $region29
    $region28: #{tpu_custom_call.1} parent=1 // pred_region
      %s798 = ssub.s32 128, 128
      %799 = vsyncadd [#allocation4], %s798
      %s801 = sshll.u32 [#allocation8], 4
      %s802 = int_to_ptr.vmem [resolvable:$true] %s801
      %804 = dma.vmem_to_hbm [thread:$0]  %s802, 128, %s3, [#allocation4]
    $region29: #{tpu_custom_call.1} parent=1 // pred_fallthru
      _
    // Predicated region
    $region30: #{tpu_custom_call.1} parent=1 // pred_check
      _
    $region31: #{tpu_custom_call.1} parent=1 // pred_check_branch
      %806 = sbr.rel (0) target = $region33
    $region32: #{tpu_custom_call.1} parent=1 // pred_region
      %807 = dma.done [#allocation4], 128
    $region33: #{tpu_custom_call.1} parent=1 // pred_fallthru
      _
    %808 = vsyncpa [#allocation3], 1
    %809 = vsyncpa [#allocation6], 1
    %810 = vsyncpa [#allocation4], 1

</llo_original>
